<compile_context>
chip_gen: v5e
topology: v5e:2x2
jax: 0.10.0
libtpu: 0.0.40
codegen_flags: <defaults>
</compile_context>

<pallas_src>
import jax
import jax.numpy as jnp
from jax.experimental import pallas as pl
from jax.experimental.pallas import tpu as pltpu


def _round_up(n, m):
    return ((n + m - 1) // m) * m


def _pad_to(a, axis, size):
    pad = size - a.shape[axis]
    if pad == 0:
        return a
    widths = [(0, 0)] * a.ndim
    widths[axis] = (0, pad)
    return jnp.pad(a, widths)


def _vmem_capacity_bytes():
    try:
        info = pltpu.get_tpu_info()
        cap = getattr(info, "vmem_capacity_bytes", None)
        if cap:
            return int(cap)
    except Exception:
        pass
    return 64 * 1024 * 1024  # conservative fallback (v7x per-TC VMEM)


# ---------------------------------------------------------------------------
# Pallas kernel: one grid step per batch tile, full (Bt, Tp, D) blocks in VMEM.
# ---------------------------------------------------------------------------
def _make_fsmn_kernel(*, has_hidden, has_left, has_right,
                      left_frame, right_frame, left_dilation, right_dilation,
                      t_valid, pad_off):
    pad_r = right_dilation * right_frame if has_right else 0
    need_scratch = has_left or has_right

    def kernel(*refs):
        it = iter(refs)
        x_ref = next(it)
        hid_ref = next(it) if has_hidden else None
        w_in_ref = next(it)
        b_in_ref = next(it)
        w_l_ref = next(it) if has_left else None
        w_r_ref = next(it) if has_right else None
        w_out_ref = next(it)
        b_out_ref = next(it)
        out_ref = next(it)
        pout_ref = next(it)
        pad_ref = next(it) if need_scratch else None

        Bt, T, Din = x_ref.shape
        Hp = w_in_ref.shape[1]
        Dp = w_out_ref.shape[1]

        # ---- conv_in: 1x1 conv == (Bt*T, Din) @ (Din, Hp) on the MXU --------
        x2 = x_ref[...].reshape(Bt * T, Din).astype(w_in_ref.dtype)
        p_in2 = jnp.dot(x2, w_in_ref[...],
                        preferred_element_type=jnp.float32) + b_in_ref[...]
        p_in = p_in2.reshape(Bt, T, Hp)

        # Zero the (bias-valued) padded time frames so the FSMN taps see the
        # same constant-0 padding as the reference.
        if t_valid < T:
            tmask = jax.lax.broadcasted_iota(jnp.int32, (1, T, 1), 1) < t_valid
            p_in = jnp.where(tmask, p_in, 0.0)

        p_out = p_in

        if need_scratch:
            # Scratch time layout: [pad_off zeros | p_in (T rows) | pad_r zeros]
            # pad_off = round_up(pad_l, 8) -> the big p_in store is sublane
            # aligned.  Pad regions are re-zeroed every step (tiny cost): a
            # one-shot program_id==0 init is unsafe because the batch grid axis
            # is "parallel" and each TensorCore owns its own scratch copy.
            if pad_off > 0:
                pad_ref[:, :pad_off, :] = jnp.zeros((Bt, pad_off, Hp), jnp.float32)
            if pad_r > 0:
                pad_ref[:, pad_off + T:, :] = jnp.zeros((Bt, pad_r, Hp), jnp.float32)
            pad_ref[:, pad_off:pad_off + T, :] = p_in

        # conv_left (causal, dilated, depthwise, kernel = left_frame + 1):
        #   p_left[t, h] += w_l[k, h] * p_in[t - d_l * (left_frame - k), h]
        if has_left:
            for k in range(left_frame + 1):
                s = -left_dilation * (left_frame - k)
                tap = p_in if s == 0 else pad_ref[:, pad_off + s:pad_off + s + T, :]
                p_out = p_out + tap * w_l_ref[k:k + 1, :]

        # conv_right (anti-causal, dilated, depthwise, kernel = right_frame,
        # offset so it never touches the current frame):
        #   p_right[t, h] += w_r[k, h] * p_in[t + d_r * (k + 1), h]
        if has_right:
            for k in range(right_frame):
                s = right_dilation * (k + 1)
                tap = pad_ref[:, pad_off + s:pad_off + s + T, :]
                p_out = p_out + tap * w_r_ref[k:k + 1, :]

        if has_hidden:
            p_out = p_out + hid_ref[...]

        pout_ref[...] = p_out.astype(pout_ref.dtype)

        # ---- conv_out: (Bt*T, Hp) @ (Hp, Dp) + bias, ReLU --------------------
        out2 = jnp.dot(p_out.reshape(Bt * T, Hp).astype(w_out_ref.dtype),
                       w_out_ref[...],
                       preferred_element_type=jnp.float32) + b_out_ref[...]
        out_ref[...] = jnp.maximum(out2, 0.0).reshape(Bt, T, Dp).astype(out_ref.dtype)

    return kernel


# ---------------------------------------------------------------------------
# Wrapper
# ---------------------------------------------------------------------------
def fsmn_forward(x, params, hidden=None, *,
                 left_frame=1, right_frame=1, left_dilation=1, right_dilation=1,
                 batch_tile=None, mxu_dtype=jnp.bfloat16, pout_layout="bht"):
    """x: (B, T, input_dim); hidden (optional): (B, hidden_dim, T) like PyTorch.

    Returns (out, p_out) with out: (B, T, out_dim) and p_out: (B, hidden_dim, T)
    (or (B, T, hidden_dim) if pout_layout == "bth"), matching FsmnLayer.forward.
    mxu_dtype controls the 1x1-conv matmul operand precision (accumulation is
    always f32); set jnp.float32 for bit-tight agreement with the reference.
    """
    w_in, b_in, w_l, w_r, w_out, b_out = params

    x = x.astype(jnp.float32)
    B, T, Din = x.shape
    H = w_in.shape[1]
    Dout = w_out.shape[1]
    Hp = _round_up(H, 128)
    Dp = _round_up(Dout, 128)
    Tp = _round_up(T, 8)

    has_hidden = hidden is not None
    has_left = left_frame > 0
    has_right = right_frame > 0
    need_scratch = has_left or has_right

    # --- weights: pad feature dims to lane multiples; matmul weights in the
    # MXU dtype, everything elementwise stays f32 --------------------------------
    w_in_p = _pad_to(w_in, 1, Hp).astype(mxu_dtype)
    b_in_p = _pad_to(b_in, 1, Hp).astype(jnp.float32)
    w_out_p = _pad_to(_pad_to(w_out, 0, Hp), 1, Dp).astype(mxu_dtype)
    b_out_p = _pad_to(b_out, 1, Dp).astype(jnp.float32)
    w_l_p = _pad_to(w_l, 1, Hp).astype(jnp.float32) if has_left else None
    w_r_p = _pad_to(w_r, 1, Hp).astype(jnp.float32) if has_right else None

    # --- activations: pad T to a sublane multiple (masked in-kernel) -----------
    x_p = _pad_to(x, 1, Tp)
    if has_hidden:
        hid_p = jnp.transpose(hidden, (0, 2, 1)).astype(jnp.float32)
        hid_p = _pad_to(_pad_to(hid_p, 1, Tp), 2, Hp)

    pad_l = left_dilation * left_frame if has_left else 0
    pad_r = right_dilation * right_frame if has_right else 0
    pad_off = _round_up(pad_l, 8) if need_scratch else 0
    T_scr = pad_off + Tp + pad_r

    # --- VMEM-budgeted batch tile + scoped-VMEM limit ---------------------------
    MiB = 1024 * 1024
    vmem_cap = _vmem_capacity_bytes()
    small_vmem = vmem_cap <= 80 * MiB            # v7x-class: 64 MiB/TC, 2 TCs
    budget = 26 * MiB if small_vmem else 44 * MiB

    wsz = 2 if mxu_dtype in (jnp.bfloat16, jnp.float16) else 4
    fixed = 2 * (Din * Hp * wsz + Hp * Dp * wsz              # w_in, w_out (x2 buffers)
                 + 4 * (Hp + Dp
                        + ((left_frame + 1) * Hp if has_left else 0)
                        + (right_frame * Hp if has_right else 0)))
    per_b = 4 * 2 * Tp * (Din + Dp + Hp * (2 if has_hidden else 1))  # x/out/pout(/hid) x2
    per_b += (4 * T_scr * Hp if need_scratch else 0)                 # scratch (single)
    per_b += 4 * 2 * Tp * Hp                                         # f32 temporaries

    if batch_tile is None:
        bt = max(1, min(B, (budget - fixed) // max(per_b, 1)))
        if small_vmem and B >= 2:
            bt = min(bt, max(1, B // 2))         # keep >= 2 grid steps for 2 TCs
        while bt > 1 and B % bt:
            bt -= 1
        batch_tile = bt
    Bt = batch_tile
    assert B % Bt == 0

    need = fixed + per_b * Bt
    vmem_limit = int(min(vmem_cap - 4 * MiB, max(2 * need + 8 * MiB, 48 * MiB)))

    kernel = _make_fsmn_kernel(
        has_hidden=has_hidden, has_left=has_left, has_right=has_right,
        left_frame=left_frame, right_frame=right_frame,
        left_dilation=left_dilation, right_dilation=right_dilation,
        t_valid=T, pad_off=pad_off)

    in_specs = [pl.BlockSpec((Bt, Tp, Din), lambda b: (b, 0, 0))]
    inputs = [x_p]
    if has_hidden:
        in_specs.append(pl.BlockSpec((Bt, Tp, Hp), lambda b: (b, 0, 0)))
        inputs.append(hid_p)
    in_specs += [pl.BlockSpec((Din, Hp), lambda b: (0, 0)),
                 pl.BlockSpec((1, Hp), lambda b: (0, 0))]
    inputs += [w_in_p, b_in_p]
    if has_left:
        in_specs.append(pl.BlockSpec((left_frame + 1, Hp), lambda b: (0, 0)))
        inputs.append(w_l_p)
    if has_right:
        in_specs.append(pl.BlockSpec((right_frame, Hp), lambda b: (0, 0)))
        inputs.append(w_r_p)
    in_specs += [pl.BlockSpec((Hp, Dp), lambda b: (0, 0)),
                 pl.BlockSpec((1, Dp), lambda b: (0, 0))]
    inputs += [w_out_p, b_out_p]

    scratch_shapes = ([pltpu.VMEM((Bt, T_scr, Hp), jnp.float32)]
                      if need_scratch else [])

    flops = (2 * B * Tp * (Din * Hp + Hp * Dp)
             + 2 * B * Tp * Hp * ((left_frame + 1 if has_left else 0)
                                  + (right_frame if has_right else 0)))
    bytes_accessed = (4 * B * Tp * (Din + Dp + Hp * (2 if has_hidden else 1))
                      + fixed // 2)
    cost = pl.CostEstimate(flops=int(flops), transcendentals=0,
                           bytes_accessed=int(bytes_accessed))

    out_p, pout_p = pl.pallas_call(
        kernel,
        out_shape=(jax.ShapeDtypeStruct((B, Tp, Dp), jnp.float32),
                   jax.ShapeDtypeStruct((B, Tp, Hp), jnp.float32)),
        grid=(B // Bt,),
        in_specs=in_specs,
        out_specs=(pl.BlockSpec((Bt, Tp, Dp), lambda b: (b, 0, 0)),
                   pl.BlockSpec((Bt, Tp, Hp), lambda b: (b, 0, 0))),
        scratch_shapes=scratch_shapes,
        compiler_params=pltpu.CompilerParams(
            dimension_semantics=("parallel",),
            vmem_limit_bytes=vmem_limit),
        cost_estimate=cost,
    )(*inputs)

    out = out_p[:, :T, :Dout] if (Tp != T or Dp != Dout) else out_p
    pout_bth = pout_p[:, :T, :H] if (Tp != T or Hp != H) else pout_p
    if pout_layout == "bht":
        # PyTorch returns p_out in (B, hidden_dim, T); pass pout_layout="bth"
        # to skip this extra transpose when the consumer accepts (B, T, H).
        return out, jnp.transpose(pout_bth, (0, 2, 1))
    return out, pout_bth


# ---------------------------------------------------------------------------
# Pure-JAX reference (mirrors the PyTorch forward) for correctness checking.
# ---------------------------------------------------------------------------
def fsmn_reference(x, params, hidden=None, *,
                   left_frame=1, right_frame=1, left_dilation=1, right_dilation=1):
    w_in, b_in, w_l, w_r, w_out, b_out = params
    B, T, Din = x.shape
    p_in = jnp.einsum("btd,dh->bth", x, w_in) + b_in

    p_out = p_in
    if left_frame > 0:
        for k in range(left_frame + 1):
            s = left_dilation * (left_frame - k)
            shifted = p_in if s == 0 else jnp.pad(p_in, ((0, 0), (s, 0), (0, 0)))[:, :T, :]
            p_out = p_out + shifted * w_l[k]
    if right_frame > 0:
        for k in range(right_frame):
            s = right_dilation * (k + 1)
            shifted = jnp.pad(p_in, ((0, 0), (0, s), (0, 0)))[:, s:, :]
            p_out = p_out + shifted * w_r[k]
    if hidden is not None:
        p_out = p_out + jnp.transpose(hidden, (0, 2, 1))
    out = jax.nn.relu(jnp.einsum("bth,ho->bto", p_out, w_out) + b_out)
    return out, jnp.transpose(p_out, (0, 2, 1))


# ---------------------------------------------------------------------------
# Deterministic parameter construction (shapes from FsmnLayer.__init__).
# ---------------------------------------------------------------------------
def init_params(key, input_dim, hidden_dim, out_dim, left_frame, right_frame):
    ks = jax.random.split(key, 6)
    # conv_in.weight (H, Din, 1) -> stored as (Din, H); conv_in.bias (H,)
    w_in = 0.1 * jax.random.normal(ks[0], (input_dim, hidden_dim), jnp.float32)
    b_in = 0.1 * jax.random.normal(ks[1], (1, hidden_dim), jnp.float32)
    # conv_left.weight (H, 1, left_frame+1) depthwise -> stored as (left_frame+1, H)
    w_l = (0.1 * jax.random.normal(ks[2], (left_frame + 1, hidden_dim), jnp.float32)
           if left_frame > 0 else None)
    # conv_right.weight (H, 1, right_frame) depthwise -> stored as (right_frame, H)
    w_r = (0.1 * jax.random.normal(ks[3], (right_frame, hidden_dim), jnp.float32)
           if right_frame > 0 else None)
    # conv_out.weight (Dout, H, 1) -> stored as (H, Dout); conv_out.bias (Dout,)
    w_out = 0.1 * jax.random.normal(ks[4], (hidden_dim, out_dim), jnp.float32)
    b_out = 0.1 * jax.random.normal(ks[5], (1, out_dim), jnp.float32)
    return (w_in, b_in, w_l, w_r, w_out, b_out)


if __name__ == "__main__":
    def run_case(name, key, *, B, T, input_dim, hidden_dim, out_dim,
                 left_frame, right_frame, left_dilation, right_dilation,
                 with_hidden, mxu_dtype, atol, rtol):
        kx, kh, kp = jax.random.split(key, 3)
        x = jax.random.normal(kx, (B, T, input_dim), jnp.float32)
        hidden = (jax.random.normal(kh, (B, hidden_dim, T), jnp.float32)
                  if with_hidden else None)
        params = init_params(kp, input_dim, hidden_dim, out_dim,
                             left_frame, right_frame)
        cfg = dict(left_frame=left_frame, right_frame=right_frame,
                   left_dilation=left_dilation, right_dilation=right_dilation)
        out, pout = fsmn_forward(x, params, hidden, mxu_dtype=mxu_dtype, **cfg)
        jax.block_until_ready((out, pout))
        ref_out, ref_pout = fsmn_reference(x, params, hidden, **cfg)
        ok = (jnp.allclose(out, ref_out, atol=atol, rtol=rtol)
              and jnp.allclose(pout, ref_pout, atol=atol, rtol=rtol))
        if not bool(ok):
            raise AssertionError(f"Pallas FSMN kernel mismatch in case '{name}'")

    key = jax.random.PRNGKey(0)
    k1, k2, k3 = jax.random.split(key, 3)

    # (a) hidden=None, f32 MXU operands -> tight tolerance
    run_case("no_hidden_f32", k1, B=2, T=16, input_dim=32, hidden_dim=16,
             out_dim=32, left_frame=2, right_frame=2, left_dilation=1,
             right_dilation=2, with_hidden=False, mxu_dtype=jnp.float32,
             atol=1e-5, rtol=1e-5)
    # (b) hidden provided, bf16 MXU operands (default) -> relaxed tolerance
    run_case("hidden_bf16", k2, B=2, T=16, input_dim=32, hidden_dim=16,
             out_dim=32, left_frame=2, right_frame=2, left_dilation=1,
             right_dilation=2, with_hidden=True, mxu_dtype=jnp.bfloat16,
             atol=3e-2, rtol=3e-2)
    # (c) right_frame == 0 and T not a multiple of 8 (exercises the module's
    #     optional-branch config and the time-pad masking path)
    run_case("left_only_t12", k3, B=3, T=12, input_dim=32, hidden_dim=16,
             out_dim=32, left_frame=1, right_frame=0, left_dilation=2,
             right_dilation=1, with_hidden=False, mxu_dtype=jnp.float32,
             atol=1e-5, rtol=1e-5)

    print("KERNEL_OK")
</pallas_src>

<mosaic_0001>
module attributes {stable_mosaic.version = 11 : i64} {
  func.func @kernel(%arg0: i32, %arg1: memref<1x16x32xf32, #tpu.memory_space<vmem>>, %arg2: memref<32x128xf32, #tpu.memory_space<vmem>>, %arg3: memref<1x128xf32, #tpu.memory_space<vmem>>, %arg4: memref<3x128xf32, #tpu.memory_space<vmem>>, %arg5: memref<2x128xf32, #tpu.memory_space<vmem>>, %arg6: memref<128x128xf32, #tpu.memory_space<vmem>>, %arg7: memref<1x128xf32, #tpu.memory_space<vmem>>, %arg8: memref<1x16x128xf32, #tpu.memory_space<vmem>>, %arg9: memref<1x16x128xf32, #tpu.memory_space<vmem>>, %arg10: memref<1x28x128xf32, #tpu.memory_space<vmem>>) attributes {dimension_semantics = [#tpu.dimension_semantics<parallel>], iteration_bounds = array<i64: 2>, scalar_prefetch = 0 : i64, scratch_operands = 1 : i64, tpu.core_type = #tpu.core_type<tc>, window_params = [{transform_indices = @transform_0, window_bounds = array<i64: 1, 16, 32>}, {pipeline_mode = #tpu.pipeline_mode<synchronous>, transform_indices = @transform_1, window_bounds = array<i64: 32, 128>}, {pipeline_mode = #tpu.pipeline_mode<synchronous>, transform_indices = @transform_2, window_bounds = array<i64: 1, 128>}, {pipeline_mode = #tpu.pipeline_mode<synchronous>, transform_indices = @transform_3, window_bounds = array<i64: 3, 128>}, {pipeline_mode = #tpu.pipeline_mode<synchronous>, transform_indices = @transform_4, window_bounds = array<i64: 2, 128>}, {pipeline_mode = #tpu.pipeline_mode<synchronous>, transform_indices = @transform_5, window_bounds = array<i64: 128, 128>}, {pipeline_mode = #tpu.pipeline_mode<synchronous>, transform_indices = @transform_6, window_bounds = array<i64: 1, 128>}, {transform_indices = @transform_7, window_bounds = array<i64: 1, 16, 128>}, {transform_indices = @transform_8, window_bounds = array<i64: 1, 16, 128>}]} {
    %c0 = arith.constant 0 : index
    %c0_0 = arith.constant 0 : index
    %c0_1 = arith.constant 0 : index
    %0 = vector.load %arg1[%c0, %c0_0, %c0_1] : memref<1x16x32xf32, #tpu.memory_space<vmem>>, vector<1x16x32xf32>
    %1 = vector.shape_cast %0 : vector<1x16x32xf32> to vector<16x32xf32>
    %c0_2 = arith.constant 0 : index
    %c0_3 = arith.constant 0 : index
    %2 = vector.load %arg2[%c0_2, %c0_3] : memref<32x128xf32, #tpu.memory_space<vmem>>, vector<32x128xf32>
    %cst = arith.constant dense<0.000000e+00> : vector<16x128xf32>
    %3 = tpu.matmul %1, %2, %cst {dimension_numbers = #tpu.dot_dimension_numbers<[1], [0], [0], [1], [0, 0, 1, 1], [], []>} : vector<16x32xf32>, vector<32x128xf32>, vector<16x128xf32> -> vector<16x128xf32>
    %c0_4 = arith.constant 0 : index
    %c0_5 = arith.constant 0 : index
    %4 = vector.load %arg3[%c0_4, %c0_5] : memref<1x128xf32, #tpu.memory_space<vmem>>, vector<1x128xf32>
    %5 = vector.broadcast %4 : vector<1x128xf32> to vector<16x128xf32>
    %6 = arith.addf %3, %5 : vector<16x128xf32>
    %7 = vector.shape_cast %6 : vector<16x128xf32> to vector<1x16x128xf32>
    %cst_6 = arith.constant 0.000000e+00 : f32
    %8 = vector.broadcast %cst_6 : f32 to vector<1x8x128xf32>
    %c0_7 = arith.constant 0 : index
    %c0_8 = arith.constant 0 : index
    %c0_9 = arith.constant 0 : index
    %9 = vector.load %arg10[%c0_7, %c0_8, %c0_9] : memref<1x28x128xf32, #tpu.memory_space<vmem>>, vector<1x8x128xf32>
    tpu.vector_store %arg10[%c0_7, %c0_8, %c0_9], %8 {strides = array<i32>} : memref<1x28x128xf32, #tpu.memory_space<vmem>>, vector<1x8x128xf32>,
    %cst_10 = arith.constant 0.000000e+00 : f32
    %10 = vector.broadcast %cst_10 : f32 to vector<1x4x128xf32>
    %c0_11 = arith.constant 0 : index
    %c24 = arith.constant 24 : index
    %c0_12 = arith.constant 0 : index
    %11 = vector.load %arg10[%c0_11, %c24, %c0_12] : memref<1x28x128xf32, #tpu.memory_space<vmem>>, vector<1x4x128xf32>
    tpu.vector_store %arg10[%c0_11, %c24, %c0_12], %10 {strides = array<i32>} : memref<1x28x128xf32, #tpu.memory_space<vmem>>, vector<1x4x128xf32>,
    %c0_13 = arith.constant 0 : index
    %c8 = arith.constant 8 : index
    %c0_14 = arith.constant 0 : index
    %12 = vector.load %arg10[%c0_13, %c8, %c0_14] : memref<1x28x128xf32, #tpu.memory_space<vmem>>, vector<1x16x128xf32>
    tpu.vector_store %arg10[%c0_13, %c8, %c0_14], %7 {strides = array<i32>} : memref<1x28x128xf32, #tpu.memory_space<vmem>>, vector<1x16x128xf32>,
    %c0_15 = arith.constant 0 : index
    %c6 = arith.constant 6 : index
    %c0_16 = arith.constant 0 : index
    %13 = vector.load %arg10[%c0_15, %c6, %c0_16] : memref<1x28x128xf32, #tpu.memory_space<vmem>>, vector<1x16x128xf32>
    %c0_17 = arith.constant 0 : index
    %c0_18 = arith.constant 0 : index
    %14 = vector.load %arg4[%c0_17, %c0_18] : memref<3x128xf32, #tpu.memory_space<vmem>>, vector<1x128xf32>
    %15 = vector.shape_cast %14 : vector<1x128xf32> to vector<1x1x128xf32>
    %16 = vector.broadcast %15 : vector<1x1x128xf32> to vector<1x16x128xf32>
    %17 = arith.mulf %13, %16 : vector<1x16x128xf32>
    %18 = arith.addf %7, %17 : vector<1x16x128xf32>
    %c0_19 = arith.constant 0 : index
    %c7 = arith.constant 7 : index
    %c0_20 = arith.constant 0 : index
    %19 = vector.load %arg10[%c0_19, %c7, %c0_20] : memref<1x28x128xf32, #tpu.memory_space<vmem>>, vector<1x16x128xf32>
    %c1 = arith.constant 1 : index
    %c0_21 = arith.constant 0 : index
    %20 = vector.load %arg4[%c1, %c0_21] : memref<3x128xf32, #tpu.memory_space<vmem>>, vector<1x128xf32>
    %21 = vector.shape_cast %20 : vector<1x128xf32> to vector<1x1x128xf32>
    %22 = vector.broadcast %21 : vector<1x1x128xf32> to vector<1x16x128xf32>
    %23 = arith.mulf %19, %22 : vector<1x16x128xf32>
    %24 = arith.addf %18, %23 : vector<1x16x128xf32>
    %c2 = arith.constant 2 : index
    %c0_22 = arith.constant 0 : index
    %25 = vector.load %arg4[%c2, %c0_22] : memref<3x128xf32, #tpu.memory_space<vmem>>, vector<1x128xf32>
    %26 = vector.shape_cast %25 : vector<1x128xf32> to vector<1x1x128xf32>
    %27 = vector.broadcast %26 : vector<1x1x128xf32> to vector<1x16x128xf32>
    %28 = arith.mulf %7, %27 : vector<1x16x128xf32>
    %29 = arith.addf %24, %28 : vector<1x16x128xf32>
    %c0_23 = arith.constant 0 : index
    %c10 = arith.constant 10 : index
    %c0_24 = arith.constant 0 : index
    %30 = vector.load %arg10[%c0_23, %c10, %c0_24] : memref<1x28x128xf32, #tpu.memory_space<vmem>>, vector<1x16x128xf32>
    %c0_25 = arith.constant 0 : index
    %c0_26 = arith.constant 0 : index
    %31 = vector.load %arg5[%c0_25, %c0_26] : memref<2x128xf32, #tpu.memory_space<vmem>>, vector<1x128xf32>
    %32 = vector.shape_cast %31 : vector<1x128xf32> to vector<1x1x128xf32>
    %33 = vector.broadcast %32 : vector<1x1x128xf32> to vector<1x16x128xf32>
    %34 = arith.mulf %30, %33 : vector<1x16x128xf32>
    %35 = arith.addf %29, %34 : vector<1x16x128xf32>
    %c0_27 = arith.constant 0 : index
    %c12 = arith.constant 12 : index
    %c0_28 = arith.constant 0 : index
    %36 = vector.load %arg10[%c0_27, %c12, %c0_28] : memref<1x28x128xf32, #tpu.memory_space<vmem>>, vector<1x16x128xf32>
    %c1_29 = arith.constant 1 : index
    %c0_30 = arith.constant 0 : index
    %37 = vector.load %arg5[%c1_29, %c0_30] : memref<2x128xf32, #tpu.memory_space<vmem>>, vector<1x128xf32>
    %38 = vector.shape_cast %37 : vector<1x128xf32> to vector<1x1x128xf32>
    %39 = vector.broadcast %38 : vector<1x1x128xf32> to vector<1x16x128xf32>
    %40 = arith.mulf %36, %39 : vector<1x16x128xf32>
    %41 = arith.addf %35, %40 : vector<1x16x128xf32>
    %c0_31 = arith.constant 0 : index
    %c0_32 = arith.constant 0 : index
    %c0_33 = arith.constant 0 : index
    %42 = vector.load %arg9[%c0_31, %c0_32, %c0_33] : memref<1x16x128xf32, #tpu.memory_space<vmem>>, vector<1x16x128xf32>
    tpu.vector_store %arg9[%c0_31, %c0_32, %c0_33], %41 {strides = array<i32>} : memref<1x16x128xf32, #tpu.memory_space<vmem>>, vector<1x16x128xf32>,
    %43 = vector.shape_cast %41 : vector<1x16x128xf32> to vector<16x128xf32>
    %c0_34 = arith.constant 0 : index
    %c0_35 = arith.constant 0 : index
    %44 = vector.load %arg6[%c0_34, %c0_35] : memref<128x128xf32, #tpu.memory_space<vmem>>, vector<128x128xf32>
    %cst_36 = arith.constant dense<0.000000e+00> : vector<16x128xf32>
    %45 = tpu.matmul %43, %44, %cst_36 {dimension_numbers = #tpu.dot_dimension_numbers<[1], [0], [0], [1], [0, 0, 1, 1], [], []>} : vector<16x128xf32>, vector<128x128xf32>, vector<16x128xf32> -> vector<16x128xf32>
    %c0_37 = arith.constant 0 : index
    %c0_38 = arith.constant 0 : index
    %46 = vector.load %arg7[%c0_37, %c0_38] : memref<1x128xf32, #tpu.memory_space<vmem>>, vector<1x128xf32>
    %47 = vector.broadcast %46 : vector<1x128xf32> to vector<16x128xf32>
    %48 = arith.addf %45, %47 : vector<16x128xf32>
    %cst_39 = arith.constant 0.000000e+00 : f32
    %49 = vector.broadcast %cst_39 : f32 to vector<16x128xf32>
    %50 = arith.maximumf %48, %49 : vector<16x128xf32>
    %51 = vector.shape_cast %50 : vector<16x128xf32> to vector<1x16x128xf32>
    %c0_40 = arith.constant 0 : index
    %c0_41 = arith.constant 0 : index
    %c0_42 = arith.constant 0 : index
    %52 = vector.load %arg8[%c0_40, %c0_41, %c0_42] : memref<1x16x128xf32, #tpu.memory_space<vmem>>, vector<1x16x128xf32>
    tpu.vector_store %arg8[%c0_40, %c0_41, %c0_42], %51 {strides = array<i32>} : memref<1x16x128xf32, #tpu.memory_space<vmem>>, vector<1x16x128xf32>,
    return
  }
  func.func @transform_0(%arg0: i32) -> (i32, i32, i32) {
    %c0_i32 = arith.constant 0 : i32
    %c0_i32_0 = arith.constant 0 : i32
    %c0_i32_1 = arith.constant 0 : i32
    return %arg0, %c0_i32, %c0_i32_0 : i32, i32, i32
  }
  func.func @transform_1(%arg0: i32) -> (i32, i32) {
    %c0_i32 = arith.constant 0 : i32
    %c0_i32_0 = arith.constant 0 : i32
    %c0_i32_1 = arith.constant 0 : i32
    return %c0_i32, %c0_i32_0 : i32, i32
  }
  func.func @transform_2(%arg0: i32) -> (i32, i32) {
    %c0_i32 = arith.constant 0 : i32
    %c0_i32_0 = arith.constant 0 : i32
    %c0_i32_1 = arith.constant 0 : i32
    return %c0_i32, %c0_i32_0 : i32, i32
  }
  func.func @transform_3(%arg0: i32) -> (i32, i32) {
    %c0_i32 = arith.constant 0 : i32
    %c0_i32_0 = arith.constant 0 : i32
    %c0_i32_1 = arith.constant 0 : i32
    return %c0_i32, %c0_i32_0 : i32, i32
  }
  func.func @transform_4(%arg0: i32) -> (i32, i32) {
    %c0_i32 = arith.constant 0 : i32
    %c0_i32_0 = arith.constant 0 : i32
    %c0_i32_1 = arith.constant 0 : i32
    return %c0_i32, %c0_i32_0 : i32, i32
  }
  func.func @transform_5(%arg0: i32) -> (i32, i32) {
    %c0_i32 = arith.constant 0 : i32
    %c0_i32_0 = arith.constant 0 : i32
    %c0_i32_1 = arith.constant 0 : i32
    return %c0_i32, %c0_i32_0 : i32, i32
  }
  func.func @transform_6(%arg0: i32) -> (i32, i32) {
    %c0_i32 = arith.constant 0 : i32
    %c0_i32_0 = arith.constant 0 : i32
    %c0_i32_1 = arith.constant 0 : i32
    return %c0_i32, %c0_i32_0 : i32, i32
  }
  func.func @transform_7(%arg0: i32) -> (i32, i32, i32) {
    %c0_i32 = arith.constant 0 : i32
    %c0_i32_0 = arith.constant 0 : i32
    %c0_i32_1 = arith.constant 0 : i32
    return %arg0, %c0_i32, %c0_i32_0 : i32, i32, i32
  }
  func.func @transform_8(%arg0: i32) -> (i32, i32, i32) {
    %c0_i32 = arith.constant 0 : i32
    %c0_i32_0 = arith.constant 0 : i32
    %c0_i32_1 = arith.constant 0 : i32
    return %arg0, %c0_i32, %c0_i32_0 : i32, i32, i32
  }
}

</mosaic_0001>

<llo_original>
// kernel: tpu_custom_call.1
$region0: #{tpu_custom_call.1}
  #allocation0 [shape = 'u32[]', space=smem, size = 0x4, offset = 0x4, fixed_abs, tag = 'smem constant byte address 0x4 - core index']
  #allocation1 [shape = 'u32[72,128]{1,0:T(1,128)}', space=vmem, size = 0x9000, scoped, tag = 'internal scratch']
  #allocation2 [shape = 'f32[1,28,128]{2,1,0:T(8,128)}', space=vmem, size = 0x4000, scoped, tag = 'scratch operand']
  %s0 = inlined_call_operand.hbm [shape: f32[2,16,32], index: 0, kind: input, shape index: {}]
  %s1 = inlined_call_operand.hbm [shape: f32[32,128], index: 1, kind: input, shape index: {}]
  %s2 = inlined_call_operand.vmem [shape: f32[1,128], index: 2, kind: input, shape index: {}]
  %s3 = inlined_call_operand.hbm [shape: f32[3,128], index: 3, kind: input, shape index: {}]
  %s4 = inlined_call_operand.vmem [shape: f32[2,128], index: 4, kind: input, shape index: {}]
  %s5 = inlined_call_operand.hbm [shape: f32[128,128], index: 5, kind: input, shape index: {}]
  %s6 = inlined_call_operand.vmem [shape: f32[1,128], index: 6, kind: input, shape index: {}]
  %s7 = inlined_call_operand.hbm [shape: f32[2,16,128], index: 7, kind: output, shape index: {0}]
  %s8 = inlined_call_operand.hbm [shape: f32[2,16,128], index: 8, kind: output, shape index: {1}]
  %9 = xla_tuple %s7, %s8
  %s10 = sld [smem:[#allocation0]]
  $region85: #{tpu_custom_call.1} parent=0
    _
  %s12 = ssub.s32 1, %s10
  %s13 = scalar_select 0, %s12, %s10
  $region1: #{tpu_custom_call.1} parent=0
    #allocation3 [shape = 'u8[16384]{0}', space=vmem, size = 0x4000, scoped, tag = 'input window, operand 0']
    #allocation4 [shape = 's32[2]{0}', space=sflag, size = 0x8, scoped, tag = 'scoped memory for tpu_custom_call.1']
    #allocation5 [shape = 's32[2]{0}', space=sflag, size = 0x8, scoped, tag = 'scoped memory for tpu_custom_call.1']
    #allocation6 [shape = 'u8[16384]{0}', space=vmem, size = 0x4000, scoped, tag = 'input window, operand 1, single buffered']
    #allocation7 [shape = 's32[1]{0}', space=sflag, size = 0x4, scoped, tag = 'scoped memory for tpu_custom_call.1']
    #allocation8 [shape = 'u8[2048]{0}', space=vmem, size = 0x800, scoped, tag = 'input window, operand 3, single buffered']
    #allocation9 [shape = 'u8[65536]{0}', space=vmem, size = 0x10000, scoped, tag = 'input window, operand 5, single buffered']
    #allocation10 [shape = 's32[1]{0}', space=sflag, size = 0x4, scoped, tag = 'scoped memory for tpu_custom_call.1']
    #allocation11 [shape = 'u8[16384]{0}', space=vmem, size = 0x4000, scoped, tag = 'output window, operand 0']
    #allocation12 [shape = 'u8[16384]{0}', space=vmem, size = 0x4000, scoped, tag = 'output window, operand 1']
    #allocation13 [shape = 's32[2]{0}', space=sflag, size = 0x8, scoped, tag = 'scoped memory for tpu_custom_call.1']
    %14 = vsyncpa [#allocation4], 0
    %s15 = scalar_lea.sflag [#allocation4], 1
    %16 = vsyncpa %s15, 0
    %17 = vsyncpa [#allocation7], 0
    %18 = vsyncpa [#allocation10], 0
    %19 = vsyncpa [#allocation5], 0
    %s20 = scalar_lea.sflag [#allocation5], 1
    %21 = vsyncpa %s20, 0
    %22 = vsyncpa [#allocation13], 0
    %s23 = scalar_lea.sflag [#allocation13], 1
    %24 = vsyncpa %s23, 0
    loop: start=0, step=1, limit=4
    $region2: #{tpu_custom_call.1} parent=1 // loop_pre_header
      _
    $region3: #{tpu_custom_call.1} parent=1 // loop_header
      %s26 = sphi 0, %s30
      %p27 = scmp.ge.s32.totalorder %s26, 4
      %s36 = sphi 0, %s38
      %s39 = sphi 0, %s36
      %s40 = sphi 0, %s39
      %s56 = sphi 0, %s40
      %s60 = sphi 0, %s60
      %s62 = sphi 0, %s60
      %s63 = sphi 0, %s62
      %s77 = sphi 0, %s63
      %s81 = sphi 0, %s81
      %s83 = sphi 0, %s81
      %s84 = sphi 0, %s83
      %s98 = sphi 0, %s84
      %s102 = sphi 0, %s102
      %s104 = sphi 0, %s102
      %s105 = sphi 0, %s104
      %s119 = sphi 0, %s105
      %s123 = sphi 0, %s123
      %s125 = sphi 0, %s123
      %s126 = sphi 0, %s125
      %s140 = sphi 0, %s126
      %s144 = sphi 0, %s144
      %s146 = sphi 0, %s144
      %s147 = sphi 0, %s146
      %s161 = sphi 0, %s147
      %s165 = sphi 0, %s165
      %s167 = sphi 0, %s165
      %s168 = sphi 0, %s167
      %s182 = sphi 0, %s168
      %s188 = sphi 0, %s190
      %s191 = sphi 0, %s188
      %s192 = sphi 0, %s191
      %s208 = sphi 0, %s192
      %s214 = sphi 0, %s216
      %s217 = sphi 0, %s214
      %s218 = sphi 0, %s217
      %s234 = sphi 0, %s218
    $region4: #{tpu_custom_call.1} parent=1 // loop_header_branch
      %29 = sbr.rel (%p27) target = $region8
    $region5: #{tpu_custom_call.1} parent=1 // loop_body
      %s31 = ssub.s32 %s26, 1
      %s32 = ssub.s32 %s26, 2
      %s33 = sadd.s32 %s26, 1
      %s34 = ssub.s32 %s26, %s33
      %p35 = scmp.eq.s32.totalorder %s34, 0
      %s37 = sadd.s32 %s36, 1
      %s38 = scalar_select %p35, %s36, %s37
      %p41 = pneg %p35
      %p42 = scmp.eq.s32.totalorder %s26, 1
      %p43 = por %p41, %p42
      %p44 = scmp.ne.s32.totalorder %s36, %s39
      %p45 = scmp.eq.s32.totalorder %s26, 0
      %p46 = por %p44, %p45
      %p47 = scmp.ne.s32.totalorder %s36, %s39
      %p48 = scmp.eq.s32.totalorder %s31, 1
      %p49 = por %p47, %p48
      %p50 = scmp.ne.s32.totalorder %s39, %s40
      %p51 = scmp.eq.s32.totalorder %s31, 0
      %p52 = por %p50, %p51
      %p53 = scmp.ne.s32.totalorder %s39, %s40
      %p54 = scmp.eq.s32.totalorder %s32, 1
      %p55 = por %p53, %p54
      %p57 = scmp.ne.s32.totalorder %s40, %s56
      %p58 = scmp.eq.s32.totalorder %s32, 0
      %p59 = por %p57, %p58
      %s61 = sadd.s32 %s60, 1
      %p64 = scmp.eq.s32.totalorder %s26, 1
      %p65 = scmp.ne.s32.totalorder %s60, %s62
      %p66 = scmp.eq.s32.totalorder %s26, 0
      %p67 = por %p65, %p66
      %p68 = scmp.ne.s32.totalorder %s60, %s62
      %p69 = scmp.eq.s32.totalorder %s31, 1
      %p70 = por %p68, %p69
      %p71 = scmp.ne.s32.totalorder %s62, %s63
      %p72 = scmp.eq.s32.totalorder %s31, 0
      %p73 = por %p71, %p72
      %p74 = scmp.ne.s32.totalorder %s62, %s63
      %p75 = scmp.eq.s32.totalorder %s32, 1
      %p76 = por %p74, %p75
      %p78 = scmp.ne.s32.totalorder %s63, %s77
      %p79 = scmp.eq.s32.totalorder %s32, 0
      %p80 = por %p78, %p79
      %s82 = sadd.s32 %s81, 1
      %p85 = scmp.eq.s32.totalorder %s26, 1
      %p86 = scmp.ne.s32.totalorder %s81, %s83
      %p87 = scmp.eq.s32.totalorder %s26, 0
      %p88 = por %p86, %p87
      %p89 = scmp.ne.s32.totalorder %s81, %s83
      %p90 = scmp.eq.s32.totalorder %s31, 1
      %p91 = por %p89, %p90
      %p92 = scmp.ne.s32.totalorder %s83, %s84
      %p93 = scmp.eq.s32.totalorder %s31, 0
      %p94 = por %p92, %p93
      %p95 = scmp.ne.s32.totalorder %s83, %s84
      %p96 = scmp.eq.s32.totalorder %s32, 1
      %p97 = por %p95, %p96
      %p99 = scmp.ne.s32.totalorder %s84, %s98
      %p100 = scmp.eq.s32.totalorder %s32, 0
      %p101 = por %p99, %p100
      %s103 = sadd.s32 %s102, 1
      %p106 = scmp.eq.s32.totalorder %s26, 1
      %p107 = scmp.ne.s32.totalorder %s102, %s104
      %p108 = scmp.eq.s32.totalorder %s26, 0
      %p109 = por %p107, %p108
      %p110 = scmp.ne.s32.totalorder %s102, %s104
      %p111 = scmp.eq.s32.totalorder %s31, 1
      %p112 = por %p110, %p111
      %p113 = scmp.ne.s32.totalorder %s104, %s105
      %p114 = scmp.eq.s32.totalorder %s31, 0
      %p115 = por %p113, %p114
      %p116 = scmp.ne.s32.totalorder %s104, %s105
      %p117 = scmp.eq.s32.totalorder %s32, 1
      %p118 = por %p116, %p117
      %p120 = scmp.ne.s32.totalorder %s105, %s119
      %p121 = scmp.eq.s32.totalorder %s32, 0
      %p122 = por %p120, %p121
      %s124 = sadd.s32 %s123, 1
      %p127 = scmp.eq.s32.totalorder %s26, 1
      %p128 = scmp.ne.s32.totalorder %s123, %s125
      %p129 = scmp.eq.s32.totalorder %s26, 0
      %p130 = por %p128, %p129
      %p131 = scmp.ne.s32.totalorder %s123, %s125
      %p132 = scmp.eq.s32.totalorder %s31, 1
      %p133 = por %p131, %p132
      %p134 = scmp.ne.s32.totalorder %s125, %s126
      %p135 = scmp.eq.s32.totalorder %s31, 0
      %p136 = por %p134, %p135
      %p137 = scmp.ne.s32.totalorder %s125, %s126
      %p138 = scmp.eq.s32.totalorder %s32, 1
      %p139 = por %p137, %p138
      %p141 = scmp.ne.s32.totalorder %s126, %s140
      %p142 = scmp.eq.s32.totalorder %s32, 0
      %p143 = por %p141, %p142
      %s145 = sadd.s32 %s144, 1
      %p148 = scmp.eq.s32.totalorder %s26, 1
      %p149 = scmp.ne.s32.totalorder %s144, %s146
      %p150 = scmp.eq.s32.totalorder %s26, 0
      %p151 = por %p149, %p150
      %p152 = scmp.ne.s32.totalorder %s144, %s146
      %p153 = scmp.eq.s32.totalorder %s31, 1
      %p154 = por %p152, %p153
      %p155 = scmp.ne.s32.totalorder %s146, %s147
      %p156 = scmp.eq.s32.totalorder %s31, 0
      %p157 = por %p155, %p156
      %p158 = scmp.ne.s32.totalorder %s146, %s147
      %p159 = scmp.eq.s32.totalorder %s32, 1
      %p160 = por %p158, %p159
      %p162 = scmp.ne.s32.totalorder %s147, %s161
      %p163 = scmp.eq.s32.totalorder %s32, 0
      %p164 = por %p162, %p163
      %s166 = sadd.s32 %s165, 1
      %p169 = scmp.eq.s32.totalorder %s26, 1
      %p170 = scmp.ne.s32.totalorder %s165, %s167
      %p171 = scmp.eq.s32.totalorder %s26, 0
      %p172 = por %p170, %p171
      %p173 = scmp.ne.s32.totalorder %s165, %s167
      %p174 = scmp.eq.s32.totalorder %s31, 1
      %p175 = por %p173, %p174
      %p176 = scmp.ne.s32.totalorder %s167, %s168
      %p177 = scmp.eq.s32.totalorder %s31, 0
      %p178 = por %p176, %p177
      %p179 = scmp.ne.s32.totalorder %s167, %s168
      %p180 = scmp.eq.s32.totalorder %s32, 1
      %p181 = por %p179, %p180
      %p183 = scmp.ne.s32.totalorder %s168, %s182
      %p184 = scmp.eq.s32.totalorder %s32, 0
      %p185 = por %p183, %p184
      %s186 = ssub.s32 %s26, %s33
      %p187 = scmp.eq.s32.totalorder %s186, 0
      %s189 = sadd.s32 %s188, 1
      %s190 = scalar_select %p187, %s188, %s189
      %p193 = pneg %p187
      %p194 = scmp.eq.s32.totalorder %s26, 1
      %p195 = por %p193, %p194
      %p196 = scmp.ne.s32.totalorder %s188, %s191
      %p197 = scmp.eq.s32.totalorder %s26, 0
      %p198 = por %p196, %p197
      %p199 = scmp.ne.s32.totalorder %s188, %s191
      %p200 = scmp.eq.s32.totalorder %s31, 1
      %p201 = por %p199, %p200
      %p202 = scmp.ne.s32.totalorder %s191, %s192
      %p203 = scmp.eq.s32.totalorder %s31, 0
      %p204 = por %p202, %p203
      %p205 = scmp.ne.s32.totalorder %s191, %s192
      %p206 = scmp.eq.s32.totalorder %s32, 1
      %p207 = por %p205, %p206
      %p209 = scmp.ne.s32.totalorder %s192, %s208
      %p210 = scmp.eq.s32.totalorder %s32, 0
      %p211 = por %p209, %p210
      %s212 = ssub.s32 %s26, %s33
      %p213 = scmp.eq.s32.totalorder %s212, 0
      %s215 = sadd.s32 %s214, 1
      %s216 = scalar_select %p213, %s214, %s215
      %p219 = pneg %p213
      %p220 = scmp.eq.s32.totalorder %s26, 1
      %p221 = por %p219, %p220
      %p222 = scmp.ne.s32.totalorder %s214, %s217
      %p223 = scmp.eq.s32.totalorder %s26, 0
      %p224 = por %p222, %p223
      %p225 = scmp.ne.s32.totalorder %s214, %s217
      %p226 = scmp.eq.s32.totalorder %s31, 1
      %p227 = por %p225, %p226
      %p228 = scmp.ne.s32.totalorder %s217, %s218
      %p229 = scmp.eq.s32.totalorder %s31, 0
      %p230 = por %p228, %p229
      %p231 = scmp.ne.s32.totalorder %s217, %s218
      %p232 = scmp.eq.s32.totalorder %s32, 1
      %p233 = por %p231, %p232
      %p235 = scmp.ne.s32.totalorder %s218, %s234
      %p236 = scmp.eq.s32.totalorder %s32, 0
      %p237 = por %p235, %p236
      %p238 = scmp.le.s32.totalorder 1, %s26
      %p239 = scmp.lt.s32.totalorder %s26, 3
      %p240 = pnand %p238, %p239
      %p241 = pneg %p240
      // Predicated region
      $region9: #{tpu_custom_call.1} parent=5 // pred_check
        _
      $region10: #{tpu_custom_call.1} parent=5 // pred_check_branch
        %243 = sbr.rel (%p240) target = $region12
      $region11: #{tpu_custom_call.1} parent=5 // pred_region
        %s244 = ssub.s32 %s26, 1
        // Predicated region
        $region13: #{tpu_custom_call.1} parent=11 // pred_check
          %p245 = pneg %p73
        $region14: #{tpu_custom_call.1} parent=11 // pred_check_branch
          %247 = sbr.rel (%p245) target = $region16
        $region15: #{tpu_custom_call.1} parent=11 // pred_region
          %249 = vsyncadd [#allocation7], 0
          %s250 = sshll.u32 %s1, 4
          %s251 = int_to_ptr.hbm [resolvable:$true] %s250
          %s252 = sshll.u32 [#allocation6], 4
          %s253 = int_to_ptr.vmem [resolvable:$true] %s252
          %258 = dma.hbm_to_vmem [thread:$0]  %s251, 512, %s253, [#allocation7], 128, 128, 8
        $region16: #{tpu_custom_call.1} parent=11 // pred_fallthru
          _
        // Predicated region
        $region17: #{tpu_custom_call.1} parent=11 // pred_check
          %p259 = pneg %p94
        $region18: #{tpu_custom_call.1} parent=11 // pred_check_branch
          %261 = sbr.rel (%p259) target = $region20
        $region19: #{tpu_custom_call.1} parent=11 // pred_region
          _
        $region20: #{tpu_custom_call.1} parent=11 // pred_fallthru
          _
        // Predicated region
        $region21: #{tpu_custom_call.1} parent=11 // pred_check
          %p262 = pneg %p115
        $region22: #{tpu_custom_call.1} parent=11 // pred_check_branch
          %264 = sbr.rel (%p262) target = $region24
        $region23: #{tpu_custom_call.1} parent=11 // pred_region
          %266 = vsyncadd [#allocation7], 0
          %s268 = sshll.u32 %s3, 4
          %s269 = int_to_ptr.hbm [resolvable:$true] %s268
          %s270 = sshll.u32 [#allocation8], 4
          %s271 = int_to_ptr.vmem [resolvable:$true] %s270
          %273 = dma.hbm_to_vmem [thread:$0]  %s269, 64, %s271, [#allocation7]
        $region24: #{tpu_custom_call.1} parent=11 // pred_fallthru
          _
        // Predicated region
        $region25: #{tpu_custom_call.1} parent=11 // pred_check
          %p274 = pneg %p136
        $region26: #{tpu_custom_call.1} parent=11 // pred_check_branch
          %276 = sbr.rel (%p274) target = $region28
        $region27: #{tpu_custom_call.1} parent=11 // pred_region
          _
        $region28: #{tpu_custom_call.1} parent=11 // pred_fallthru
          _
        // Predicated region
        $region29: #{tpu_custom_call.1} parent=11 // pred_check
          %p277 = pneg %p157
        $region30: #{tpu_custom_call.1} parent=11 // pred_check_branch
          %279 = sbr.rel (%p277) target = $region32
        $region31: #{tpu_custom_call.1} parent=11 // pred_region
          %281 = vsyncadd [#allocation10], 0
          %s282 = sshll.u32 %s5, 4
          %s283 = int_to_ptr.hbm [resolvable:$true] %s282
          %s284 = sshll.u32 [#allocation9], 4
          %s285 = int_to_ptr.vmem [resolvable:$true] %s284
          %290 = dma.hbm_to_vmem [thread:$0]  %s283, 2048, %s285, [#allocation10], 128, 128, 8
        $region32: #{tpu_custom_call.1} parent=11 // pred_fallthru
          _
        // Predicated region
        $region33: #{tpu_custom_call.1} parent=11 // pred_check
          %p291 = pneg %p178
        $region34: #{tpu_custom_call.1} parent=11 // pred_check_branch
          %293 = sbr.rel (%p291) target = $region36
        $region35: #{tpu_custom_call.1} parent=11 // pred_region
          _
        $region36: #{tpu_custom_call.1} parent=11 // pred_fallthru
          _
      $region12: #{tpu_custom_call.1} parent=5 // pred_fallthru
        _
      %p294 = scmp.lt.s32.totalorder %s26, 2
      // Predicated region
      $region37: #{tpu_custom_call.1} parent=5 // pred_check
        %p295 = pneg %p294
      $region38: #{tpu_custom_call.1} parent=5 // pred_check_branch
        %297 = sbr.rel (%p295) target = $region40
      $region39: #{tpu_custom_call.1} parent=5 // pred_region
        // Predicated region
        $region41: #{tpu_custom_call.1} parent=39 // pred_check
          %p298 = pneg %p46
        $region42: #{tpu_custom_call.1} parent=39 // pred_check_branch
          %300 = sbr.rel (%p298) target = $region44
        $region43: #{tpu_custom_call.1} parent=39 // pred_region
          %s301 = sand.u32 %s36, 1
          %s302 = scalar_lea.sflag [#allocation4], %s301
          %s303 = sand.u32 %s36, 1
          %s304 = smul.addr %s303, 16
          %s305 = scalar_lea.vmem [#allocation3], %s304
          %307 = vsyncadd %s302, 0
          %s308 = smul.addr %s26, 2
          %s309 = smul.addr %s308, 8
          %s310 = scalar_lea.hbm %s0, %s309
          %s311 = sshll.u32 %s310, 4
          %s312 = int_to_ptr.hbm [resolvable:$true] %s311
          %s313 = sshll.u32 %s305, 4
          %s314 = int_to_ptr.vmem [resolvable:$true] %s313
          %319 = dma.hbm_to_vmem [thread:$0]  %s312, 256, %s314, %s302, 128, 128, 8
        $region44: #{tpu_custom_call.1} parent=39 // pred_fallthru
          _
      $region40: #{tpu_custom_call.1} parent=5 // pred_fallthru
        _
      %p320 = scmp.le.s32.totalorder 1, %s26
      %p321 = scmp.lt.s32.totalorder %s26, 3
      %p322 = pnand %p320, %p321
      %p323 = pneg %p322
      // Predicated region
      $region45: #{tpu_custom_call.1} parent=5 // pred_check
        _
      $region46: #{tpu_custom_call.1} parent=5 // pred_check_branch
        %325 = sbr.rel (%p322) target = $region48
      $region47: #{tpu_custom_call.1} parent=5 // pred_region
        %s326 = ssub.s32 %s26, 1
        %s327 = sand.u32 %s39, 1
        %s328 = scalar_lea.sflag [#allocation4], %s327
        %s329 = sand.u32 %s39, 1
        %s330 = smul.addr %s329, 16
        %s331 = scalar_lea.vmem [#allocation3], %s330
        // Predicated region
        $region49: #{tpu_custom_call.1} parent=47 // pred_check
          %p332 = pneg %p52
        $region50: #{tpu_custom_call.1} parent=47 // pred_check_branch
          %334 = sbr.rel (%p332) target = $region52
        $region51: #{tpu_custom_call.1} parent=47 // pred_region
          %336 = dma.done %s328, 256
        $region52: #{tpu_custom_call.1} parent=47 // pred_fallthru
          _
        // Predicated region
        $region53: #{tpu_custom_call.1} parent=47 // pred_check
          %p337 = pneg %p73
        $region54: #{tpu_custom_call.1} parent=47 // pred_check_branch
          %339 = sbr.rel (%p337) target = $region56
        $region55: #{tpu_custom_call.1} parent=47 // pred_region
          %341 = dma.done [#allocation7], 512
        $region56: #{tpu_custom_call.1} parent=47 // pred_fallthru
          _
        // Predicated region
        $region57: #{tpu_custom_call.1} parent=47 // pred_check
          %p342 = pneg %p115
        $region58: #{tpu_custom_call.1} parent=47 // pred_check_branch
          %344 = sbr.rel (%p342) target = $region60
        $region59: #{tpu_custom_call.1} parent=47 // pred_region
          %346 = dma.done [#allocation7], 64
        $region60: #{tpu_custom_call.1} parent=47 // pred_fallthru
          _
        // Predicated region
        $region61: #{tpu_custom_call.1} parent=47 // pred_check
          %p347 = pneg %p157
        $region62: #{tpu_custom_call.1} parent=47 // pred_check_branch
          %349 = sbr.rel (%p347) target = $region64
        $region63: #{tpu_custom_call.1} parent=47 // pred_region
          %351 = dma.done [#allocation10], 2048
        $region64: #{tpu_custom_call.1} parent=47 // pred_fallthru
          _
        %s352 = sand.u32 %s39, 1
        %s353 = scalar_lea.sflag [#allocation4], %s352
        %s354 = sand.u32 %s39, 1
        %s355 = smul.addr %s354, 16
        %s356 = scalar_lea.vmem [#allocation3], %s355
        %p357 = pneg %p52
        %p358 = pneg %p49
        %p359 = pneg %p73
        %p360 = pneg %p70
        %p361 = pneg %p94
        %p362 = pneg %p91
        %p363 = pneg %p115
        %p364 = pneg %p112
        %p365 = pneg %p136
        %p366 = pneg %p133
        %p367 = pneg %p157
        %p368 = pneg %p154
        %p369 = pneg %p178
        %p370 = pneg %p175
        %p371 = pneg %p204
        %p372 = pneg %p201
        %s373 = sand.u32 %s191, 1
        %s374 = scalar_lea.sflag [#allocation5], %s373
        %s375 = sand.u32 %s191, 1
        %s376 = smul.addr %s375, 16
        %s377 = scalar_lea.vmem [#allocation11], %s376
        %p378 = pneg %p230
        %p379 = pneg %p227
        %s380 = sand.u32 %s217, 1
        %s381 = scalar_lea.sflag [#allocation13], %s380
        %s382 = sand.u32 %s217, 1
        %s383 = smul.addr %s382, 16
        %s384 = scalar_lea.vmem [#allocation12], %s383
        %v385 = vld [vmem:[%s331] sm:$0xff]
        %v386 = vld [vmem:[%s331 + $0x8] sm:$0xff]
        %v387 = vld [vmem:[#allocation6] sm:$0xff]
        %v388 = vld [vmem:[#allocation6 + $0x8] sm:$0xff]
        %v389 = vld [vmem:[#allocation6 + $0x10] sm:$0xff]
        %v390 = vld [vmem:[#allocation6 + $0x18] sm:$0xff]
        %v391 = vld [vmem:[%s2] sm:$0x1]
        %v393 = vperm.slane %v391, 0
        %vm395 = vcmask 261120
        %v397 = vsel %vm395, %v385, 0
        %v400 = vsel %vm395, %v386, 0
        %402 = vmatpush.msra.mxu0 0.0
        %403 = vmatpush.msra.mxu0 0.0
        %404 = vmatpush.msra.mxu0 0.0
        %405 = vmatpush.msra.mxu0 0.0
        %406 = vmatpush.msra.mxu0 0.0
        %407 = vmatpush.msra.mxu0 0.0
        %408 = vmatpush.msra.mxu0 0.0
        %409 = vmatpush.msra.mxu0 0.0
        %410 = vmatpush.msra.mxu0 0.0
        %411 = vmatpush.msra.mxu0 0.0
        %412 = vmatpush.msra.mxu0 0.0
        %413 = vmatpush.msra.mxu0 0.0
        %414 = vmatpush.msra.mxu0 %v390
        %415 = vmatpush.msra.mxu0 %v389
        %416 = vmatpush.msra.mxu0 %v388
        %417 = vmatpush.msra.mxu0 %v387
        %418 = vmatmul.f32.gmra.mxu0 %v397
        %v419 = vpop.f32.mrf.mxu0
        %v420 = vadd.f32 %v393, %v419
        %421 = vmatmul.f32.gmra.mxu0 %v400
        %v422 = vpop.f32.mrf.mxu0
        %v423 = vadd.f32 %v393, %v422
        %424 = vdwg.mxu0
        %425 = vst [vmem:[#allocation2] sm:$0xff] 0.0
        %426 = vst [vmem:[#allocation2 + $0x18] sm:$0xf] 0.0
        %427 = vst [vmem:[#allocation2 + $0x8] sm:$0xff] %v420
        %428 = vst [vmem:[#allocation2 + $0x10] sm:$0xff] %v423
        %v429 = vld [vmem:[#allocation2 + $0x6] sm:$0xff]
        %v430 = vld [vmem:[#allocation2 + $0xe] sm:$0xff]
        %v431 = vld [vmem:[#allocation8] sm:$0x1]
        %v432 = vperm.slane %v431, 0
        %v433 = vmul.f32 %v429, %v432
        %v434 = vmul.f32 %v430, %v432
        %v435 = vadd.f32 %v420, %v433
        %v436 = vadd.f32 %v423, %v434
        %v437 = vld [vmem:[#allocation2 + $0x7] sm:$0xff]
        %v438 = vld [vmem:[#allocation2 + $0xf] sm:$0xff]
        %v439 = vld [vmem:[#allocation8 + $0x1] sm:$0x1]
        %v440 = vperm.slane %v439, 0
        %v441 = vmul.f32 %v437, %v440
        %v442 = vmul.f32 %v438, %v440
        %v443 = vadd.f32 %v435, %v441
        %v444 = vadd.f32 %v436, %v442
        %v445 = vld [vmem:[#allocation8 + $0x2] sm:$0x1]
        %v446 = vperm.slane %v445, 0
        %v447 = vmul.f32 %v420, %v446
        %v448 = vmul.f32 %v423, %v446
        %v449 = vadd.f32 %v443, %v447
        %v450 = vadd.f32 %v444, %v448
        %v451 = vld [vmem:[#allocation2 + $0xa] sm:$0xff]
        %v452 = vld [vmem:[#allocation2 + $0x12] sm:$0xff]
        %v453 = vld [vmem:[%s4] sm:$0x1]
        %v454 = vperm.slane %v453, 0
        %v455 = vmul.f32 %v451, %v454
        %v456 = vmul.f32 %v452, %v454
        %v457 = vadd.f32 %v449, %v455
        %v458 = vadd.f32 %v450, %v456
        %v459 = vld [vmem:[#allocation2 + $0xc] sm:$0xff]
        %v460 = vld [vmem:[#allocation2 + $0x14] sm:$0xff]
        %v461 = vld [vmem:[%s4 + $0x1] sm:$0x1]
        %v462 = vperm.slane %v461, 0
        %v463 = vmul.f32 %v459, %v462
        %v464 = vmul.f32 %v460, %v462
        %v465 = vadd.f32 %v457, %v463
        %v466 = vadd.f32 %v458, %v464
        %467 = vst [vmem:[%s384] sm:$0xff] %v465
        %468 = vst [vmem:[%s384 + $0x8] sm:$0xff] %v466
        %v469 = vld [vmem:[#allocation9] sm:$0xff]
        %v470 = vld [vmem:[#allocation9 + $0x8] sm:$0xff]
        %v471 = vld [vmem:[#allocation9 + $0x10] sm:$0xff]
        %v472 = vld [vmem:[#allocation9 + $0x18] sm:$0xff]
        %v473 = vld [vmem:[#allocation9 + $0x20] sm:$0xff]
        %v474 = vld [vmem:[#allocation9 + $0x28] sm:$0xff]
        %v475 = vld [vmem:[#allocation9 + $0x30] sm:$0xff]
        %v476 = vld [vmem:[#allocation9 + $0x38] sm:$0xff]
        %v477 = vld [vmem:[#allocation9 + $0x40] sm:$0xff]
        %v478 = vld [vmem:[#allocation9 + $0x48] sm:$0xff]
        %v479 = vld [vmem:[#allocation9 + $0x50] sm:$0xff]
        %v480 = vld [vmem:[#allocation9 + $0x58] sm:$0xff]
        %v481 = vld [vmem:[#allocation9 + $0x60] sm:$0xff]
        %v482 = vld [vmem:[#allocation9 + $0x68] sm:$0xff]
        %v483 = vld [vmem:[#allocation9 + $0x70] sm:$0xff]
        %v484 = vld [vmem:[#allocation9 + $0x78] sm:$0xff]
        %v485 = vld [vmem:[%s6] sm:$0x1]
        %v487 = vperm.slane %v485, 0
        %489 = vmatpush.msra.mxu0 %v484
        %490 = vmatpush.msra.mxu0 %v483
        %491 = vmatpush.msra.mxu0 %v482
        %492 = vmatpush.msra.mxu0 %v481
        %493 = vmatpush.msra.mxu0 %v480
        %494 = vmatpush.msra.mxu0 %v479
        %495 = vmatpush.msra.mxu0 %v478
        %496 = vmatpush.msra.mxu0 %v477
        %497 = vmatpush.msra.mxu0 %v476
        %498 = vmatpush.msra.mxu0 %v475
        %499 = vmatpush.msra.mxu0 %v474
        %500 = vmatpush.msra.mxu0 %v473
        %501 = vmatpush.msra.mxu0 %v472
        %502 = vmatpush.msra.mxu0 %v471
        %503 = vmatpush.msra.mxu0 %v470
        %504 = vmatpush.msra.mxu0 %v469
        %505 = vmatmul.f32.gmra.mxu0 %v465
        %v506 = vpop.f32.mrf.mxu0
        %v507 = vadd.f32 %v487, %v506
        %508 = vmatmul.f32.gmra.mxu0 %v466
        %v509 = vpop.f32.mrf.mxu0
        %v510 = vadd.f32 %v487, %v509
        %511 = vdwg.mxu0
        %v512 = vmax.f32 %v507, 0.0
        %v513 = vmax.f32 %v510, 0.0
        %514 = vst [vmem:[%s377] sm:$0xff] %v512
        %515 = vst [vmem:[%s377 + $0x8] sm:$0xff] %v513
        %s516 = sand.u32 %s191, 1
        %s517 = scalar_lea.sflag [#allocation5], %s516
        %s518 = sand.u32 %s191, 1
        %s519 = smul.addr %s518, 16
        %s520 = scalar_lea.vmem [#allocation11], %s519
        %s521 = sand.u32 %s217, 1
        %s522 = scalar_lea.sflag [#allocation13], %s521
        %s523 = sand.u32 %s217, 1
        %s524 = smul.addr %s523, 16
        %s525 = scalar_lea.vmem [#allocation12], %s524
        // Predicated region
        $region65: #{tpu_custom_call.1} parent=47 // pred_check
          %p526 = pneg %p201
        $region66: #{tpu_custom_call.1} parent=47 // pred_check_branch
          %528 = sbr.rel (%p526) target = $region68
        $region67: #{tpu_custom_call.1} parent=47 // pred_region
          %530 = vsyncadd %s517, 0
          %s531 = smul.addr %s31, 2
          %s532 = smul.addr %s531, 8
          %s533 = scalar_lea.hbm %s7, %s532
          %s534 = sshll.u32 %s520, 4
          %s535 = int_to_ptr.vmem [resolvable:$true] %s534
          %s536 = sshll.u32 %s533, 4
          %s537 = int_to_ptr.hbm [resolvable:$true] %s536
          %542 = dma.vmem_to_hbm [thread:$0]  %s535, 256, %s537, %s517, 128, 128, 8
        $region68: #{tpu_custom_call.1} parent=47 // pred_fallthru
          _
        // Predicated region
        $region69: #{tpu_custom_call.1} parent=47 // pred_check
          %p543 = pneg %p227
        $region70: #{tpu_custom_call.1} parent=47 // pred_check_branch
          %545 = sbr.rel (%p543) target = $region72
        $region71: #{tpu_custom_call.1} parent=47 // pred_region
          %547 = vsyncadd %s522, 0
          %s548 = smul.addr %s31, 2
          %s549 = smul.addr %s548, 8
          %s550 = scalar_lea.hbm %s8, %s549
          %s551 = sshll.u32 %s525, 4
          %s552 = int_to_ptr.vmem [resolvable:$true] %s551
          %s553 = sshll.u32 %s550, 4
          %s554 = int_to_ptr.hbm [resolvable:$true] %s553
          %559 = dma.vmem_to_hbm [thread:$0]  %s552, 256, %s554, %s522, 128, 128, 8
        $region72: #{tpu_custom_call.1} parent=47 // pred_fallthru
          _
      $region48: #{tpu_custom_call.1} parent=5 // pred_fallthru
        _
      %p560 = scmp.le.s32.totalorder 2, %s26
      // Predicated region
      $region73: #{tpu_custom_call.1} parent=5 // pred_check
        %p561 = pneg %p560
      $region74: #{tpu_custom_call.1} parent=5 // pred_check_branch
        %563 = sbr.rel (%p561) target = $region76
      $region75: #{tpu_custom_call.1} parent=5 // pred_region
        %s564 = ssub.s32 %s26, 2
        // Predicated region
        $region77: #{tpu_custom_call.1} parent=75 // pred_check
          %p565 = pneg %p207
        $region78: #{tpu_custom_call.1} parent=75 // pred_check_branch
          %567 = sbr.rel (%p565) target = $region80
        $region79: #{tpu_custom_call.1} parent=75 // pred_region
          %s568 = sand.u32 %s192, 1
          %s569 = scalar_lea.sflag [#allocation5], %s568
          %s570 = sand.u32 %s192, 1
          %s571 = smul.addr %s570, 16
          %s572 = scalar_lea.vmem [#allocation11], %s571
          %574 = dma.done %s569, 256
        $region80: #{tpu_custom_call.1} parent=75 // pred_fallthru
          _
        // Predicated region
        $region81: #{tpu_custom_call.1} parent=75 // pred_check
          %p575 = pneg %p233
        $region82: #{tpu_custom_call.1} parent=75 // pred_check_branch
          %577 = sbr.rel (%p575) target = $region84
        $region83: #{tpu_custom_call.1} parent=75 // pred_region
          %s578 = sand.u32 %s218, 1
          %s579 = scalar_lea.sflag [#allocation13], %s578
          %s580 = sand.u32 %s218, 1
          %s581 = smul.addr %s580, 16
          %s582 = scalar_lea.vmem [#allocation12], %s581
          %584 = dma.done %s579, 256
        $region84: #{tpu_custom_call.1} parent=75 // pred_fallthru
          _
      $region76: #{tpu_custom_call.1} parent=5 // pred_fallthru
        _
    $region6: #{tpu_custom_call.1} parent=1 // loop_footer
      %s30 = sadd.s32 1, %s26
    $region7: #{tpu_custom_call.1} parent=1 // loop_footer_branch
      %25 = sbr.rel target = $region3
    $region8: #{tpu_custom_call.1} parent=1 // loop_exit
      _
    %585 = vsyncpa [#allocation4], 1
    %s586 = scalar_lea.sflag [#allocation4], 1
    %587 = vsyncpa %s586, 1
    %588 = vsyncpa [#allocation7], 1
    %589 = vsyncpa [#allocation10], 1
    %590 = vsyncpa [#allocation5], 1
    %s591 = scalar_lea.sflag [#allocation5], 1
    %592 = vsyncpa %s591, 1
    %593 = vsyncpa [#allocation13], 1
    %s594 = scalar_lea.sflag [#allocation13], 1
    %595 = vsyncpa %s594, 1

</llo_original>
